<compile_context>
chip_gen: v7x
topology: tpu7x:2x2x1
jax: 0.10.0
libtpu: 0.0.40
codegen_flags: <defaults>
</compile_context>

<pallas_src>
import functools

import jax
import jax.numpy as jnp
from jax.experimental import pallas as pl
from jax.experimental.pallas import tpu as pltpu


def _round_up(v, m):
    return (v + m - 1) // m * m


def _irrev_kernel(x_ref, wf_ref, bf_ref, wg_ref, bg_ref, y_ref, *, use_mxu):
    """One (batch, spatial-tile) step.

    x_ref / y_ref blocks: (1, 2, ch, tile_s) -- the two coupling halves on the
    size-2 axis, spatial columns in the lane dimension.  Weights are (ch, ch)
    in PyTorch Conv2d [out, in] layout, biases (ch, 1) kept in f32.
    """
    x1 = x_ref[0, 0]                      # (ch, tile_s), activation dtype
    x2 = x_ref[0, 1]
    bf = bf_ref[...]                      # (ch, 1) f32
    bg = bg_ref[...]

    if use_mxu:
        # 1x1 conv == channel-mixing matmul on the MXU: bf16 operands,
        # f32 accumulation; coupling adds stay in f32.
        f = jnp.dot(wf_ref[...], x2, preferred_element_type=jnp.float32) + bf
        y1 = x1.astype(jnp.float32) + f
        # TODO(synk): for compute-bound v7x shapes (bf16, ch >~ 1.2k) chunk
        # tile_s and interleave the f-matmul of chunk i with the g-matmul of
        # chunk i-1 to keep the MXU fed across the f->g dependency.
        g = jnp.dot(wg_ref[...], y1.astype(wg_ref.dtype),
                    preferred_element_type=jnp.float32) + bg
        y2 = x2.astype(jnp.float32) + g
    else:
        # Small channel count: the MXU K dim would be almost entirely padding,
        # so compute the 1x1 conv as an unrolled VPU broadcast-FMA chain in f32
        # (kernel stays HBM-bound either way; avoids MXU push/pop latency and
        # 4x sublane padding of the tiny (ch, tile_s) operands).
        ch = wf_ref.shape[0]
        x1f = x1.astype(jnp.float32)
        x2f = x2.astype(jnp.float32)
        wf = wf_ref[...].astype(jnp.float32)
        wg = wg_ref[...].astype(jnp.float32)

        f = jnp.broadcast_to(bf, x2f.shape)
        for i in range(ch):
            f = f + wf[:, i:i + 1] * x2f[i:i + 1, :]
        y1 = x1f + f

        g = jnp.broadcast_to(bg, x2f.shape)
        for i in range(ch):
            g = g + wg[:, i:i + 1] * y1[i:i + 1, :]
        y2 = x2f + g

    # Single cast at the final store (all adds above were done in f32).
    y_ref[0, 0] = y1.astype(y_ref.dtype)
    y_ref[0, 1] = y2.astype(y_ref.dtype)


def irreversible_block(x_nchw, wf, bf, wg, bg, *, spatial_tile_cap=None,
                       min_grid_steps=4):
    """IrreversibleBlock forward with pointwise-conv (1x1 Conv2d) f/g blocks.

    x_nchw : (B, C, H, W)   activations; their dtype (e.g. bf16) is the HBM
             storage dtype and the MXU/VPU operand dtype.
    wf, wg : (C//2, C//2)   PyTorch Conv2d [out, in] layout (1x1 dims squeezed)
    bf, bg : (C//2,)        biases (kept f32 inside the kernel)
    """
    B, C, H, W = x_nchw.shape
    assert C % 2 == 0, "channel dim must split in two"
    ch = C // 2
    S = H * W

    act_dtype = x_nchw.dtype
    act_itemsize = jnp.dtype(act_dtype).itemsize

    # Weights ride in the activation dtype (bf16 MXU operands); biases stay f32.
    wf = wf.astype(act_dtype)
    wg = wg.astype(act_dtype)
    bf2 = bf.astype(jnp.float32).reshape(ch, 1)
    bg2 = bg.astype(jnp.float32).reshape(ch, 1)

    # Free contiguous reshape (no HBM copy): NCHW -> (B, 2, ch, S); the channel
    # split/concat becomes indexing of the size-2 axis inside the kernel.
    x = x_nchw.reshape(B, 2, ch, S)

    # ---- generation-aware VMEM budget -> spatial tile size -----------------
    try:
        phys_vmem = int(pltpu.get_tpu_info().vmem_capacity_bytes)
    except Exception:
        phys_vmem = 64 * 1024 * 1024                   # v7x-safe fallback
    if phys_vmem <= 0:
        phys_vmem = 64 * 1024 * 1024
    vmem_limit = int(phys_vmem * 0.8)                  # leave compiler headroom
    vmem_budget = int(vmem_limit * 0.75)

    # Weight/bias footprint incl. sublane/lane padding.  Constant index_maps
    # are DMA'd once but still allocate two buffers by default; single-buffer
    # them once they are big enough to matter.
    w_buf = _round_up(ch, 16) * _round_up(ch, 128) * act_itemsize
    b_buf = _round_up(ch, 8) * 128 * 4
    single_buffer_weights = 2 * ch * ch * act_itemsize > (2 << 20)
    n_wbuf = 1 if single_buffer_weights else 2
    weight_bytes = n_wbuf * 2 * (w_buf + b_buf)

    # Per spatial column: in + out blocks (double-buffered, act dtype, sublane
    # padded) plus ~4 live f32 intermediates (x1/x2 casts, f/y1, g/y2).
    c_pad = 2 * _round_up(ch, 16)
    per_col = (2 * 2 * act_itemsize + 4 * 4) * c_pad

    avail = vmem_budget - weight_bytes
    if avail < per_col * 128:
        # TODO(synk): channel-tiled path (output-channel grid axis + K-reduction
        # accumulator) for C//2 so large that both (ch, ch) weights cannot stay
        # resident next to a useful activation tile.
        raise NotImplementedError(
            "C//2 too large for resident weights; channel tiling not implemented")
    cap = (avail // per_col) // 128 * 128
    if spatial_tile_cap is not None:
        cap = max(128, min(cap, spatial_tile_cap))

    # Keep at least `min_grid_steps` grid steps when possible so the v7x
    # megacore (2 TCs) has work to shard and DMA/compute overlap exists.
    s_tiles_wanted = max(1, -(-min_grid_steps // B))
    tile_split = _round_up(max(128, -(-S // s_tiles_wanted)), 128)
    tile_s = min(cap, tile_split, _round_up(S, 128))

    num_s_tiles = pl.cdiv(S, tile_s)
    grid = (B, num_s_tiles)

    # No jnp.pad / trailing slice for ragged S: the last spatial block is
    # partially out-of-bounds; Pallas pads the read and masks the write-back.

    act_spec = pl.BlockSpec((1, 2, ch, tile_s), lambda b, s: (b, 0, 0, s))
    if single_buffer_weights:
        w_spec = pl.BlockSpec((ch, ch), lambda b, s: (0, 0),
                              pipeline_mode=pl.Buffered(1))
        b_spec = pl.BlockSpec((ch, 1), lambda b, s: (0, 0),
                              pipeline_mode=pl.Buffered(1))
    else:
        w_spec = pl.BlockSpec((ch, ch), lambda b, s: (0, 0))
        b_spec = pl.BlockSpec((ch, 1), lambda b, s: (0, 0))

    use_mxu = ch >= 32   # below this the MXU contraction dim is mostly padding

    y = pl.pallas_call(
        functools.partial(_irrev_kernel, use_mxu=use_mxu),
        out_shape=jax.ShapeDtypeStruct((B, 2, ch, S), act_dtype),
        grid_spec=pltpu.PrefetchScalarGridSpec(
            num_scalar_prefetch=0,
            grid=grid,
            in_specs=[act_spec, w_spec, b_spec, w_spec, b_spec],
            out_specs=act_spec,
        ),
        compiler_params=pltpu.CompilerParams(
            dimension_semantics=("parallel", "parallel"),
            vmem_limit_bytes=vmem_limit,
        ),
    )(x, wf, bf2, wg, bg2)

    # Free contiguous reshape back: y1 occupies channels [:ch], y2 channels
    # [ch:], matching torch.cat(dim=1).
    return y.reshape(B, C, H, W)


def _reference(x_nchw, wf, bf, wg, bg):
    """Pure-JAX f32 reference mirroring the PyTorch forward (1x1-conv blocks)."""
    C = x_nchw.shape[1]
    ch = C // 2
    x = x_nchw.astype(jnp.float32)
    wf = wf.astype(jnp.float32)
    wg = wg.astype(jnp.float32)
    bf = bf.astype(jnp.float32)
    bg = bg.astype(jnp.float32)
    x1, x2 = x[:, :ch], x[:, ch:]
    f = jnp.einsum("oi,bihw->bohw", wf, x2) + bf[None, :, None, None]
    y1 = x1 + f
    g = jnp.einsum("oi,bihw->bohw", wg, y1) + bg[None, :, None, None]
    y2 = x2 + g
    return jnp.concatenate([y1, y2], axis=1)


if __name__ == "__main__":
    key = jax.random.PRNGKey(0)

    def make_inputs(k, B, C, H, W, wscale):
        ch = C // 2
        kx, kwf, kbf, kwg, kbg = jax.random.split(k, 5)
        x = jax.random.normal(kx, (B, C, H, W), dtype=jnp.float32)
        wf = jax.random.normal(kwf, (ch, ch), dtype=jnp.float32) * wscale
        bf = jax.random.normal(kbf, (ch,), dtype=jnp.float32) * 0.1
        wg = jax.random.normal(kwg, (ch, ch), dtype=jnp.float32) * wscale
        bg = jax.random.normal(kbg, (ch,), dtype=jnp.float32) * 0.1
        return x, wf, bf, wg, bg

    k0, k1, k2 = jax.random.split(key, 3)

    # --- main case: bf16 activations/weights in HBM, aligned spatial tiles ---
    x, wf, bf, wg, bg = make_inputs(k0, 2, 4, 16, 16, 0.5)
    xb, wfb, wgb = (a.astype(jnp.bfloat16) for a in (x, wf, wg))
    out = jax.block_until_ready(irreversible_block(xb, wfb, bf, wgb, bg))
    ref = _reference(xb, wfb, bf, wgb, bg)   # f32 ref on the bf16-rounded inputs
    assert out.shape == (2, 4, 16, 16) and out.dtype == jnp.bfloat16
    assert jnp.allclose(out.astype(jnp.float32), ref, atol=2e-2, rtol=2e-2), \
        "bf16 kernel mismatch vs reference"

    # --- ragged spatial extent (S=320, not tile-aligned), f32, tight check ---
    x, wf, bf, wg, bg = make_inputs(k1, 2, 4, 16, 20, 0.5)
    out = jax.block_until_ready(irreversible_block(x, wf, bf, wg, bg))
    ref = _reference(x, wf, bf, wg, bg)
    assert out.shape == (2, 4, 16, 20)
    assert jnp.allclose(out, ref, atol=1e-5, rtol=1e-5), \
        "ragged-spatial kernel mismatch vs reference"

    # --- larger channel count (C//2 = 64): bf16 MXU path ---
    x, wf, bf, wg, bg = make_inputs(k2, 1, 128, 8, 16, 0.5 / (64 ** 0.5))
    xb, wfb, wgb = (a.astype(jnp.bfloat16) for a in (x, wf, wg))
    out = jax.block_until_ready(irreversible_block(xb, wfb, bf, wgb, bg))
    ref = _reference(xb, wfb, bf, wgb, bg)
    assert out.shape == (1, 128, 8, 16)
    assert jnp.allclose(out.astype(jnp.float32), ref, atol=5e-2, rtol=5e-2), \
        "MXU-path kernel mismatch vs reference"

    print("KERNEL_OK")
</pallas_src>

<mosaic_0001>
module attributes {stable_mosaic.version = 11 : i64} {
  func.func @_irrev_kernel(%arg0: i32, %arg1: i32, %arg2: memref<1x2x2x128xbf16, #tpu.memory_space<vmem>>, %arg3: memref<2x2xbf16, #tpu.memory_space<vmem>>, %arg4: memref<2x1xf32, #tpu.memory_space<vmem>>, %arg5: memref<2x2xbf16, #tpu.memory_space<vmem>>, %arg6: memref<2x1xf32, #tpu.memory_space<vmem>>, %arg7: memref<1x2x2x128xbf16, #tpu.memory_space<vmem>>) attributes {dimension_semantics = [#tpu.dimension_semantics<parallel>, #tpu.dimension_semantics<parallel>], iteration_bounds = array<i64: 2, 2>, scalar_prefetch = 0 : i64, scratch_operands = 0 : i64, tpu.core_type = #tpu.core_type<tc>, window_params = [{transform_indices = @transform_0, window_bounds = array<i64: 1, 2, 2, 128>}, {pipeline_mode = #tpu.pipeline_mode<synchronous>, transform_indices = @transform_1, window_bounds = array<i64: 2, 2>}, {pipeline_mode = #tpu.pipeline_mode<synchronous>, transform_indices = @transform_2, window_bounds = array<i64: 2, 1>}, {pipeline_mode = #tpu.pipeline_mode<synchronous>, transform_indices = @transform_3, window_bounds = array<i64: 2, 2>}, {pipeline_mode = #tpu.pipeline_mode<synchronous>, transform_indices = @transform_4, window_bounds = array<i64: 2, 1>}, {transform_indices = @transform_5, window_bounds = array<i64: 1, 2, 2, 128>}]} {
    %c0 = arith.constant 0 : index
    %c0_0 = arith.constant 0 : index
    %c0_1 = arith.constant 0 : index
    %c0_2 = arith.constant 0 : index
    %0 = vector.load %arg2[%c0, %c0_0, %c0_1, %c0_2] : memref<1x2x2x128xbf16, #tpu.memory_space<vmem>>, vector<1x1x2x128xbf16>
    %1 = vector.shape_cast %0 : vector<1x1x2x128xbf16> to vector<2x128xbf16>
    %c0_3 = arith.constant 0 : index
    %c1 = arith.constant 1 : index
    %c0_4 = arith.constant 0 : index
    %c0_5 = arith.constant 0 : index
    %2 = vector.load %arg2[%c0_3, %c1, %c0_4, %c0_5] : memref<1x2x2x128xbf16, #tpu.memory_space<vmem>>, vector<1x1x2x128xbf16>
    %3 = vector.shape_cast %2 : vector<1x1x2x128xbf16> to vector<2x128xbf16>
    %c0_6 = arith.constant 0 : index
    %c0_7 = arith.constant 0 : index
    %4 = vector.load %arg4[%c0_6, %c0_7] : memref<2x1xf32, #tpu.memory_space<vmem>>, vector<2x1xf32>
    %c0_8 = arith.constant 0 : index
    %c0_9 = arith.constant 0 : index
    %5 = vector.load %arg6[%c0_8, %c0_9] : memref<2x1xf32, #tpu.memory_space<vmem>>, vector<2x1xf32>
    %6 = arith.extf %1 : vector<2x128xbf16> to vector<2x128xf32>
    %7 = arith.extf %3 : vector<2x128xbf16> to vector<2x128xf32>
    %c0_10 = arith.constant 0 : index
    %c0_11 = arith.constant 0 : index
    %8 = vector.load %arg3[%c0_10, %c0_11] : memref<2x2xbf16, #tpu.memory_space<vmem>>, vector<2x2xbf16>
    %9 = arith.extf %8 : vector<2x2xbf16> to vector<2x2xf32>
    %c0_12 = arith.constant 0 : index
    %c0_13 = arith.constant 0 : index
    %10 = vector.load %arg5[%c0_12, %c0_13] : memref<2x2xbf16, #tpu.memory_space<vmem>>, vector<2x2xbf16>
    %11 = arith.extf %10 : vector<2x2xbf16> to vector<2x2xf32>
    %12 = vector.shape_cast %4 : vector<2x1xf32> to vector<2x1xf32>
    %13 = vector.broadcast %12 : vector<2x1xf32> to vector<2x128xf32>
    %14 = vector.extract_strided_slice %9 {offsets = [0, 0], sizes = [2, 1], strides = [1, 1]} : vector<2x2xf32> to vector<2x1xf32>
    %15 = vector.extract_strided_slice %7 {offsets = [0, 0], sizes = [1, 128], strides = [1, 1]} : vector<2x128xf32> to vector<1x128xf32>
    %16 = vector.broadcast %14 : vector<2x1xf32> to vector<2x128xf32>
    %17 = vector.broadcast %15 : vector<1x128xf32> to vector<2x128xf32>
    %18 = arith.mulf %16, %17 : vector<2x128xf32>
    %19 = arith.addf %13, %18 : vector<2x128xf32>
    %20 = vector.extract_strided_slice %9 {offsets = [0, 1], sizes = [2, 1], strides = [1, 1]} : vector<2x2xf32> to vector<2x1xf32>
    %21 = vector.extract_strided_slice %7 {offsets = [1, 0], sizes = [1, 128], strides = [1, 1]} : vector<2x128xf32> to vector<1x128xf32>
    %22 = vector.broadcast %20 : vector<2x1xf32> to vector<2x128xf32>
    %23 = vector.broadcast %21 : vector<1x128xf32> to vector<2x128xf32>
    %24 = arith.mulf %22, %23 : vector<2x128xf32>
    %25 = arith.addf %19, %24 : vector<2x128xf32>
    %26 = arith.addf %6, %25 : vector<2x128xf32>
    %27 = vector.shape_cast %5 : vector<2x1xf32> to vector<2x1xf32>
    %28 = vector.broadcast %27 : vector<2x1xf32> to vector<2x128xf32>
    %29 = vector.extract_strided_slice %11 {offsets = [0, 0], sizes = [2, 1], strides = [1, 1]} : vector<2x2xf32> to vector<2x1xf32>
    %30 = vector.extract_strided_slice %26 {offsets = [0, 0], sizes = [1, 128], strides = [1, 1]} : vector<2x128xf32> to vector<1x128xf32>
    %31 = vector.broadcast %29 : vector<2x1xf32> to vector<2x128xf32>
    %32 = vector.broadcast %30 : vector<1x128xf32> to vector<2x128xf32>
    %33 = arith.mulf %31, %32 : vector<2x128xf32>
    %34 = arith.addf %28, %33 : vector<2x128xf32>
    %35 = vector.extract_strided_slice %11 {offsets = [0, 1], sizes = [2, 1], strides = [1, 1]} : vector<2x2xf32> to vector<2x1xf32>
    %36 = vector.extract_strided_slice %26 {offsets = [1, 0], sizes = [1, 128], strides = [1, 1]} : vector<2x128xf32> to vector<1x128xf32>
    %37 = vector.broadcast %35 : vector<2x1xf32> to vector<2x128xf32>
    %38 = vector.broadcast %36 : vector<1x128xf32> to vector<2x128xf32>
    %39 = arith.mulf %37, %38 : vector<2x128xf32>
    %40 = arith.addf %34, %39 : vector<2x128xf32>
    %41 = arith.addf %7, %40 : vector<2x128xf32>
    %42 = arith.truncf %26 : vector<2x128xf32> to vector<2x128xbf16>
    %c0_14 = arith.constant 0 : index
    %c0_15 = arith.constant 0 : index
    %c0_16 = arith.constant 0 : index
    %c0_17 = arith.constant 0 : index
    %43 = vector.load %arg7[%c0_14, %c0_15, %c0_16, %c0_17] : memref<1x2x2x128xbf16, #tpu.memory_space<vmem>>, vector<1x1x2x128xbf16>
    %44 = vector.shape_cast %43 : vector<1x1x2x128xbf16> to vector<2x128xbf16>
    %45 = vector.shape_cast %42 : vector<2x128xbf16> to vector<1x1x2x128xbf16>
    tpu.vector_store %arg7[%c0_14, %c0_15, %c0_16, %c0_17], %45 {strides = array<i32>} : memref<1x2x2x128xbf16, #tpu.memory_space<vmem>>, vector<1x1x2x128xbf16>,
    %46 = arith.truncf %41 : vector<2x128xf32> to vector<2x128xbf16>
    %c0_18 = arith.constant 0 : index
    %c1_19 = arith.constant 1 : index
    %c0_20 = arith.constant 0 : index
    %c0_21 = arith.constant 0 : index
    %47 = vector.load %arg7[%c0_18, %c1_19, %c0_20, %c0_21] : memref<1x2x2x128xbf16, #tpu.memory_space<vmem>>, vector<1x1x2x128xbf16>
    %48 = vector.shape_cast %47 : vector<1x1x2x128xbf16> to vector<2x128xbf16>
    %49 = vector.shape_cast %46 : vector<2x128xbf16> to vector<1x1x2x128xbf16>
    tpu.vector_store %arg7[%c0_18, %c1_19, %c0_20, %c0_21], %49 {strides = array<i32>} : memref<1x2x2x128xbf16, #tpu.memory_space<vmem>>, vector<1x1x2x128xbf16>,
    return
  }
  func.func @transform_0(%arg0: i32, %arg1: i32) -> (i32, i32, i32, i32) {
    %c0_i32 = arith.constant 0 : i32
    %c0_i32_0 = arith.constant 0 : i32
    %c0_i32_1 = arith.constant 0 : i32
    return %arg0, %c0_i32, %c0_i32_0, %arg1 : i32, i32, i32, i32
  }
  func.func @transform_1(%arg0: i32, %arg1: i32) -> (i32, i32) {
    %c0_i32 = arith.constant 0 : i32
    %c0_i32_0 = arith.constant 0 : i32
    %c0_i32_1 = arith.constant 0 : i32
    return %c0_i32, %c0_i32_0 : i32, i32
  }
  func.func @transform_2(%arg0: i32, %arg1: i32) -> (i32, i32) {
    %c0_i32 = arith.constant 0 : i32
    %c0_i32_0 = arith.constant 0 : i32
    %c0_i32_1 = arith.constant 0 : i32
    return %c0_i32, %c0_i32_0 : i32, i32
  }
  func.func @transform_3(%arg0: i32, %arg1: i32) -> (i32, i32) {
    %c0_i32 = arith.constant 0 : i32
    %c0_i32_0 = arith.constant 0 : i32
    %c0_i32_1 = arith.constant 0 : i32
    return %c0_i32, %c0_i32_0 : i32, i32
  }
  func.func @transform_4(%arg0: i32, %arg1: i32) -> (i32, i32) {
    %c0_i32 = arith.constant 0 : i32
    %c0_i32_0 = arith.constant 0 : i32
    %c0_i32_1 = arith.constant 0 : i32
    return %c0_i32, %c0_i32_0 : i32, i32
  }
  func.func @transform_5(%arg0: i32, %arg1: i32) -> (i32, i32, i32, i32) {
    %c0_i32 = arith.constant 0 : i32
    %c0_i32_0 = arith.constant 0 : i32
    %c0_i32_1 = arith.constant 0 : i32
    return %arg0, %c0_i32, %c0_i32_0, %arg1 : i32, i32, i32, i32
  }
}

</mosaic_0001>

<llo_original>
// kernel: tpu_custom_call.1
$region0: #{tpu_custom_call.1}
  #allocation0 [shape = 'u32[]', space=smem, size = 0x4, offset = 0x4, fixed_abs, tag = 'smem constant byte address 0x4 - core index']
  #allocation1 [shape = 'u32[144,128]{1,0:T(1,128)}', space=vmem, size = 0x12000, scoped, tag = 'internal scratch']
  %s0 = inlined_call_operand.hbm [shape: bf16[2,2,2,256], index: 0, kind: input, shape index: {}]
  %s1 = inlined_call_operand.vmem [shape: bf16[2,2], index: 1, kind: input, shape index: {}]
  %s2 = inlined_call_operand.vmem [shape: f32[2,1], index: 2, kind: input, shape index: {}]
  %s3 = inlined_call_operand.vmem [shape: bf16[2,2], index: 3, kind: input, shape index: {}]
  %s4 = inlined_call_operand.vmem [shape: f32[2,1], index: 4, kind: input, shape index: {}]
  %s5 = inlined_call_operand.hbm [shape: bf16[2,2,2,256], index: 5, kind: output, shape index: {}]
  %s6 = sld [smem:[#allocation0]]
  $region57: #{tpu_custom_call.1} parent=0
    _
  %s8 = ssub.s32 1, %s6
  %s9 = scalar_select 0, %s8, %s6
  $region1: #{tpu_custom_call.1} parent=0
    #allocation2 [shape = 'u8[2048]{0}', space=vmem, size = 0x800, scoped, tag = 'input window, operand 0']
    #allocation3 [shape = 's32[2]{0}', space=sflag, size = 0x8, scoped, tag = 'scoped memory for tpu_custom_call.1']
    #allocation4 [shape = 's32[2]{0}', space=sflag, size = 0x8, scoped, tag = 'scoped memory for tpu_custom_call.1']
    #allocation5 [shape = 'u8[2048]{0}', space=vmem, size = 0x800, scoped, tag = 'output window, operand 0']
    %10 = vsyncpa [#allocation3], 0
    %s11 = scalar_lea.sflag [#allocation3], 1
    %12 = vsyncpa %s11, 0
    %13 = vsyncpa [#allocation4], 0
    %s14 = scalar_lea.sflag [#allocation4], 1
    %15 = vsyncpa %s14, 0
    loop: start=0, step=1, limit=6
    $region2: #{tpu_custom_call.1} parent=1 // loop_pre_header
      _
    $region3: #{tpu_custom_call.1} parent=1 // loop_header
      %s17 = sphi 0, %s21
      %p18 = scmp.ge.s32.totalorder %s17, 6
      %s24 = sphi 0, %s36
      %s25 = sphi 0, %s32
      %s26 = sphi 0, %s24
      %s27 = sphi 0, %s25
      %s28 = sphi 0, %s26
      %s29 = sphi 0, %s27
      %s41 = sphi 0, %s43
      %s44 = sphi 0, %s41
      %s45 = sphi 0, %s44
      %s61 = sphi 0, %s45
      %s65 = sphi 0, %s65
      %s67 = sphi 0, %s65
      %s68 = sphi 0, %s67
      %s82 = sphi 0, %s68
      %s86 = sphi 0, %s86
      %s88 = sphi 0, %s86
      %s89 = sphi 0, %s88
      %s103 = sphi 0, %s89
      %s107 = sphi 0, %s107
      %s109 = sphi 0, %s107
      %s110 = sphi 0, %s109
      %s124 = sphi 0, %s110
      %s128 = sphi 0, %s128
      %s130 = sphi 0, %s128
      %s131 = sphi 0, %s130
      %s145 = sphi 0, %s131
      %s153 = sphi 0, %s155
      %s156 = sphi 0, %s153
      %s157 = sphi 0, %s156
      %s173 = sphi 0, %s157
    $region4: #{tpu_custom_call.1} parent=1 // loop_header_branch
      %20 = sbr.rel (%p18) target = $region8
    $region5: #{tpu_custom_call.1} parent=1 // loop_body
      %s22 = ssub.s32 %s17, 1
      %s23 = ssub.s32 %s17, 2
      %s30 = sadd.s32 1, %s25
      %p31 = scmp.ge.s32.totalorder %s30, 2
      %s32 = scalar_select %p31, 0, %s30
      %s33 = sadd.s32 1, %s24
      %s34 = scalar_select %p31, %s33, %s24
      %p35 = scmp.ge.s32.totalorder %s34, 2
      %s36 = scalar_select %p35, 0, %s34
      %s37 = ssub.s32 %s24, %s36
      %s38 = ssub.s32 %s25, %s32
      %s39 = sor.u32 %s37, %s38
      %p40 = scmp.eq.s32.totalorder %s39, 0
      %s42 = sadd.s32 %s41, 1
      %s43 = scalar_select %p40, %s41, %s42
      %p46 = pneg %p40
      %p47 = scmp.eq.s32.totalorder %s17, 3
      %p48 = por %p46, %p47
      %p49 = scmp.ne.s32.totalorder %s41, %s44
      %p50 = scmp.eq.s32.totalorder %s17, 0
      %p51 = por %p49, %p50
      %p52 = scmp.ne.s32.totalorder %s41, %s44
      %p53 = scmp.eq.s32.totalorder %s22, 3
      %p54 = por %p52, %p53
      %p55 = scmp.ne.s32.totalorder %s44, %s45
      %p56 = scmp.eq.s32.totalorder %s22, 0
      %p57 = por %p55, %p56
      %p58 = scmp.ne.s32.totalorder %s44, %s45
      %p59 = scmp.eq.s32.totalorder %s23, 3
      %p60 = por %p58, %p59
      %p62 = scmp.ne.s32.totalorder %s45, %s61
      %p63 = scmp.eq.s32.totalorder %s23, 0
      %p64 = por %p62, %p63
      %s66 = sadd.s32 %s65, 1
      %p69 = scmp.eq.s32.totalorder %s17, 3
      %p70 = scmp.ne.s32.totalorder %s65, %s67
      %p71 = scmp.eq.s32.totalorder %s17, 0
      %p72 = por %p70, %p71
      %p73 = scmp.ne.s32.totalorder %s65, %s67
      %p74 = scmp.eq.s32.totalorder %s22, 3
      %p75 = por %p73, %p74
      %p76 = scmp.ne.s32.totalorder %s67, %s68
      %p77 = scmp.eq.s32.totalorder %s22, 0
      %p78 = por %p76, %p77
      %p79 = scmp.ne.s32.totalorder %s67, %s68
      %p80 = scmp.eq.s32.totalorder %s23, 3
      %p81 = por %p79, %p80
      %p83 = scmp.ne.s32.totalorder %s68, %s82
      %p84 = scmp.eq.s32.totalorder %s23, 0
      %p85 = por %p83, %p84
      %s87 = sadd.s32 %s86, 1
      %p90 = scmp.eq.s32.totalorder %s17, 3
      %p91 = scmp.ne.s32.totalorder %s86, %s88
      %p92 = scmp.eq.s32.totalorder %s17, 0
      %p93 = por %p91, %p92
      %p94 = scmp.ne.s32.totalorder %s86, %s88
      %p95 = scmp.eq.s32.totalorder %s22, 3
      %p96 = por %p94, %p95
      %p97 = scmp.ne.s32.totalorder %s88, %s89
      %p98 = scmp.eq.s32.totalorder %s22, 0
      %p99 = por %p97, %p98
      %p100 = scmp.ne.s32.totalorder %s88, %s89
      %p101 = scmp.eq.s32.totalorder %s23, 3
      %p102 = por %p100, %p101
      %p104 = scmp.ne.s32.totalorder %s89, %s103
      %p105 = scmp.eq.s32.totalorder %s23, 0
      %p106 = por %p104, %p105
      %s108 = sadd.s32 %s107, 1
      %p111 = scmp.eq.s32.totalorder %s17, 3
      %p112 = scmp.ne.s32.totalorder %s107, %s109
      %p113 = scmp.eq.s32.totalorder %s17, 0
      %p114 = por %p112, %p113
      %p115 = scmp.ne.s32.totalorder %s107, %s109
      %p116 = scmp.eq.s32.totalorder %s22, 3
      %p117 = por %p115, %p116
      %p118 = scmp.ne.s32.totalorder %s109, %s110
      %p119 = scmp.eq.s32.totalorder %s22, 0
      %p120 = por %p118, %p119
      %p121 = scmp.ne.s32.totalorder %s109, %s110
      %p122 = scmp.eq.s32.totalorder %s23, 3
      %p123 = por %p121, %p122
      %p125 = scmp.ne.s32.totalorder %s110, %s124
      %p126 = scmp.eq.s32.totalorder %s23, 0
      %p127 = por %p125, %p126
      %s129 = sadd.s32 %s128, 1
      %p132 = scmp.eq.s32.totalorder %s17, 3
      %p133 = scmp.ne.s32.totalorder %s128, %s130
      %p134 = scmp.eq.s32.totalorder %s17, 0
      %p135 = por %p133, %p134
      %p136 = scmp.ne.s32.totalorder %s128, %s130
      %p137 = scmp.eq.s32.totalorder %s22, 3
      %p138 = por %p136, %p137
      %p139 = scmp.ne.s32.totalorder %s130, %s131
      %p140 = scmp.eq.s32.totalorder %s22, 0
      %p141 = por %p139, %p140
      %p142 = scmp.ne.s32.totalorder %s130, %s131
      %p143 = scmp.eq.s32.totalorder %s23, 3
      %p144 = por %p142, %p143
      %p146 = scmp.ne.s32.totalorder %s131, %s145
      %p147 = scmp.eq.s32.totalorder %s23, 0
      %p148 = por %p146, %p147
      %s149 = ssub.s32 %s24, %s36
      %s150 = ssub.s32 %s25, %s32
      %s151 = sor.u32 %s149, %s150
      %p152 = scmp.eq.s32.totalorder %s151, 0
      %s154 = sadd.s32 %s153, 1
      %s155 = scalar_select %p152, %s153, %s154
      %p158 = pneg %p152
      %p159 = scmp.eq.s32.totalorder %s17, 3
      %p160 = por %p158, %p159
      %p161 = scmp.ne.s32.totalorder %s153, %s156
      %p162 = scmp.eq.s32.totalorder %s17, 0
      %p163 = por %p161, %p162
      %p164 = scmp.ne.s32.totalorder %s153, %s156
      %p165 = scmp.eq.s32.totalorder %s22, 3
      %p166 = por %p164, %p165
      %p167 = scmp.ne.s32.totalorder %s156, %s157
      %p168 = scmp.eq.s32.totalorder %s22, 0
      %p169 = por %p167, %p168
      %p170 = scmp.ne.s32.totalorder %s156, %s157
      %p171 = scmp.eq.s32.totalorder %s23, 3
      %p172 = por %p170, %p171
      %p174 = scmp.ne.s32.totalorder %s157, %s173
      %p175 = scmp.eq.s32.totalorder %s23, 0
      %p176 = por %p174, %p175
      %p177 = scmp.le.s32.totalorder 1, %s17
      %p178 = scmp.lt.s32.totalorder %s17, 5
      %p179 = pnand %p177, %p178
      %p180 = pneg %p179
      // Predicated region
      $region9: #{tpu_custom_call.1} parent=5 // pred_check
        _
      $region10: #{tpu_custom_call.1} parent=5 // pred_check_branch
        %182 = sbr.rel (%p179) target = $region12
      $region11: #{tpu_custom_call.1} parent=5 // pred_region
        %s183 = ssub.s32 %s17, 1
        // Predicated region
        $region13: #{tpu_custom_call.1} parent=11 // pred_check
          %p184 = pneg %p78
        $region14: #{tpu_custom_call.1} parent=11 // pred_check_branch
          %186 = sbr.rel (%p184) target = $region16
        $region15: #{tpu_custom_call.1} parent=11 // pred_region
          _
        $region16: #{tpu_custom_call.1} parent=11 // pred_fallthru
          _
        // Predicated region
        $region17: #{tpu_custom_call.1} parent=11 // pred_check
          %p187 = pneg %p99
        $region18: #{tpu_custom_call.1} parent=11 // pred_check_branch
          %189 = sbr.rel (%p187) target = $region20
        $region19: #{tpu_custom_call.1} parent=11 // pred_region
          _
        $region20: #{tpu_custom_call.1} parent=11 // pred_fallthru
          _
        // Predicated region
        $region21: #{tpu_custom_call.1} parent=11 // pred_check
          %p190 = pneg %p120
        $region22: #{tpu_custom_call.1} parent=11 // pred_check_branch
          %192 = sbr.rel (%p190) target = $region24
        $region23: #{tpu_custom_call.1} parent=11 // pred_region
          _
        $region24: #{tpu_custom_call.1} parent=11 // pred_fallthru
          _
        // Predicated region
        $region25: #{tpu_custom_call.1} parent=11 // pred_check
          %p193 = pneg %p141
        $region26: #{tpu_custom_call.1} parent=11 // pred_check_branch
          %195 = sbr.rel (%p193) target = $region28
        $region27: #{tpu_custom_call.1} parent=11 // pred_region
          _
        $region28: #{tpu_custom_call.1} parent=11 // pred_fallthru
          _
      $region12: #{tpu_custom_call.1} parent=5 // pred_fallthru
        _
      %p196 = scmp.lt.s32.totalorder %s17, 4
      // Predicated region
      $region29: #{tpu_custom_call.1} parent=5 // pred_check
        %p197 = pneg %p196
      $region30: #{tpu_custom_call.1} parent=5 // pred_check_branch
        %199 = sbr.rel (%p197) target = $region32
      $region31: #{tpu_custom_call.1} parent=5 // pred_region
        // Predicated region
        $region33: #{tpu_custom_call.1} parent=31 // pred_check
          %p200 = pneg %p51
        $region34: #{tpu_custom_call.1} parent=31 // pred_check_branch
          %202 = sbr.rel (%p200) target = $region36
        $region35: #{tpu_custom_call.1} parent=31 // pred_region
          %s203 = sand.u32 %s41, 1
          %s204 = scalar_lea.sflag [#allocation3], %s203
          %s205 = sand.u32 %s41, 1
          %s206 = smul.addr %s205, 2
          %s207 = scalar_lea.vmem [#allocation2], %s206
          %s209 = ssub.s32 32, 32
          %210 = vsyncadd %s204, %s209
          %s211 = smul.addr %s24, 4
          %s212 = sadd.s32 %s25, %s211
          %s213 = smul.addr %s212, 16
          %s214 = scalar_lea.hbm %s0, %s213
          %s215 = sshll.u32 %s207, 4
          %s216 = int_to_ptr.vmem [resolvable:$true] %s215
          %221 = dma.hbm_to_vmem [thread:$0]  %s214, 32, %s216, %s204, 32, 16, 1
        $region36: #{tpu_custom_call.1} parent=31 // pred_fallthru
          _
      $region32: #{tpu_custom_call.1} parent=5 // pred_fallthru
        _
      %p222 = scmp.le.s32.totalorder 1, %s17
      %p223 = scmp.lt.s32.totalorder %s17, 5
      %p224 = pnand %p222, %p223
      %p225 = pneg %p224
      // Predicated region
      $region37: #{tpu_custom_call.1} parent=5 // pred_check
        _
      $region38: #{tpu_custom_call.1} parent=5 // pred_check_branch
        %227 = sbr.rel (%p224) target = $region40
      $region39: #{tpu_custom_call.1} parent=5 // pred_region
        %s228 = ssub.s32 %s17, 1
        %s229 = sand.u32 %s44, 1
        %s230 = scalar_lea.sflag [#allocation3], %s229
        %s231 = sand.u32 %s44, 1
        %s232 = smul.addr %s231, 2
        %s233 = scalar_lea.vmem [#allocation2], %s232
        // Predicated region
        $region41: #{tpu_custom_call.1} parent=39 // pred_check
          %p234 = pneg %p57
        $region42: #{tpu_custom_call.1} parent=39 // pred_check_branch
          %236 = sbr.rel (%p234) target = $region44
        $region43: #{tpu_custom_call.1} parent=39 // pred_region
          %237 = dma.done %s230, 32
        $region44: #{tpu_custom_call.1} parent=39 // pred_fallthru
          _
        %s238 = sand.u32 %s44, 1
        %s239 = scalar_lea.sflag [#allocation3], %s238
        %s240 = sand.u32 %s44, 1
        %s241 = smul.addr %s240, 2
        %s242 = scalar_lea.vmem [#allocation2], %s241
        %p243 = pneg %p57
        %p244 = pneg %p54
        %p245 = pneg %p78
        %p246 = pneg %p75
        %p247 = pneg %p99
        %p248 = pneg %p96
        %p249 = pneg %p120
        %p250 = pneg %p117
        %p251 = pneg %p141
        %p252 = pneg %p138
        %p253 = pneg %p169
        %p254 = pneg %p166
        %s255 = sand.u32 %s156, 1
        %s256 = scalar_lea.sflag [#allocation4], %s255
        %s257 = sand.u32 %s156, 1
        %s258 = smul.addr %s257, 2
        %s259 = scalar_lea.vmem [#allocation5], %s258
        %v260 = vld [vmem:[%s233] sm:$0x1]
        %s261 = scalar_lea.vmem %s233, 1 [#allocation2]
        %v262 = vld [vmem:[%s261] sm:$0x1]
        %v263 = vld [vmem:[%s2] sm:$0x3]
        %v264 = vld [vmem:[%s4] sm:$0x3]
        %v265 = vunpack.c.l.bf16 %v260
        %v266 = vunpack.c.l.bf16 %v262
        %v267 = vld [vmem:[%s1] sm:$0x1]
        %v268 = vunpack.c.l.bf16 %v267
        %v269 = vld [vmem:[%s3] sm:$0x1]
        %v270 = vunpack.c.l.bf16 %v269
        %272 = vset.pattern.permute.xlu0 0
        %273 = vperm.xlu0 %272, %v263
        %v274 = vpop.permute.xlu0 %273
        %277 = vset.pattern.permute.xlu0 0
        %278 = vperm.xlu0 %277, %v268
        %v279 = vpop.permute.xlu0 %278
        %v282 = vunpack.c.l.s4 269488144
        %v283 = vunpack.c.0.s8 %v282
        %v284 = vlaneseq
        %v285 = vshrl.u32 %v284, 7
        %v286 = vsub.s32 %v283, %v285
        %v287 = vrot.slane %v279, %v286
        %v288 = vlaneseq
        %v289 = vshrl.u32 %v288, 7
        %v290 = vsub.s32 0, %v289
        %v291 = vrot.slane %v266, %v290
        %v292 = vmul.f32 %v287, %v291
        %v293 = vadd.f32 %v274, %v292
        %294 = vset.pattern.permute.xlu0 1
        %295 = vperm.xlu0 %294, %v268
        %v296 = vpop.permute.xlu0 %295
        %v299 = vunpack.c.l.s4 269488144
        %v300 = vunpack.c.0.s8 %v299
        %v301 = vlaneseq
        %v302 = vshrl.u32 %v301, 7
        %v303 = vsub.s32 %v300, %v302
        %v304 = vrot.slane %v296, %v303
        %v305 = vlaneseq
        %v306 = vshrl.u32 %v305, 7
        %v307 = vsub.s32 1, %v306
        %v308 = vrot.slane %v266, %v307
        %v309 = vmul.f32 %v304, %v308
        %v310 = vadd.f32 %v293, %v309
        %v311 = vadd.f32 %v265, %v310
        %313 = vset.pattern.permute.xlu0 0
        %314 = vperm.xlu0 %313, %v264
        %v315 = vpop.permute.xlu0 %314
        %318 = vset.pattern.permute.xlu0 0
        %319 = vperm.xlu0 %318, %v270
        %v320 = vpop.permute.xlu0 %319
        %v323 = vunpack.c.l.s4 269488144
        %v324 = vunpack.c.0.s8 %v323
        %v325 = vlaneseq
        %v326 = vshrl.u32 %v325, 7
        %v327 = vsub.s32 %v324, %v326
        %v328 = vrot.slane %v320, %v327
        %v329 = vlaneseq
        %v330 = vshrl.u32 %v329, 7
        %v331 = vsub.s32 0, %v330
        %v332 = vrot.slane %v311, %v331
        %v333 = vmul.f32 %v328, %v332
        %v334 = vadd.f32 %v315, %v333
        %335 = vset.pattern.permute.xlu0 1
        %336 = vperm.xlu0 %335, %v270
        %v337 = vpop.permute.xlu0 %336
        %v340 = vunpack.c.l.s4 269488144
        %v341 = vunpack.c.0.s8 %v340
        %v342 = vlaneseq
        %v343 = vshrl.u32 %v342, 7
        %v344 = vsub.s32 %v341, %v343
        %v345 = vrot.slane %v337, %v344
        %v346 = vlaneseq
        %v347 = vshrl.u32 %v346, 7
        %v348 = vsub.s32 1, %v347
        %v349 = vrot.slane %v311, %v348
        %v350 = vmul.f32 %v345, %v349
        %v351 = vadd.f32 %v334, %v350
        %v352 = vadd.f32 %v266, %v351
        %v353 = vpack.c.bf16 %v311, %v311
        %354 = vst [vmem:[%s259] sm:$0x1] %v353
        %v355 = vpack.c.bf16 %v352, %v352
        %s356 = scalar_lea.vmem %s259, 1 [#allocation5]
        %357 = vst [vmem:[%s356] sm:$0x1] %v355
        %s358 = sand.u32 %s156, 1
        %s359 = scalar_lea.sflag [#allocation4], %s358
        %s360 = sand.u32 %s156, 1
        %s361 = smul.addr %s360, 2
        %s362 = scalar_lea.vmem [#allocation5], %s361
        // Predicated region
        $region45: #{tpu_custom_call.1} parent=39 // pred_check
          %p363 = pneg %p166
        $region46: #{tpu_custom_call.1} parent=39 // pred_check_branch
          %365 = sbr.rel (%p363) target = $region48
        $region47: #{tpu_custom_call.1} parent=39 // pred_region
          %s367 = ssub.s32 32, 32
          %368 = vsyncadd %s359, %s367
          %s369 = smul.addr %s26, 4
          %s370 = sadd.s32 %s27, %s369
          %s371 = smul.addr %s370, 16
          %s372 = scalar_lea.hbm %s5, %s371
          %s373 = sshll.u32 %s362, 4
          %s374 = int_to_ptr.vmem [resolvable:$true] %s373
          %379 = dma.vmem_to_hbm [thread:$0]  %s374, 32, %s372, %s359, 16, 32, 1
        $region48: #{tpu_custom_call.1} parent=39 // pred_fallthru
          _
      $region40: #{tpu_custom_call.1} parent=5 // pred_fallthru
        _
      %p380 = scmp.le.s32.totalorder 2, %s17
      // Predicated region
      $region49: #{tpu_custom_call.1} parent=5 // pred_check
        %p381 = pneg %p380
      $region50: #{tpu_custom_call.1} parent=5 // pred_check_branch
        %383 = sbr.rel (%p381) target = $region52
      $region51: #{tpu_custom_call.1} parent=5 // pred_region
        %s384 = ssub.s32 %s17, 2
        // Predicated region
        $region53: #{tpu_custom_call.1} parent=51 // pred_check
          %p385 = pneg %p172
        $region54: #{tpu_custom_call.1} parent=51 // pred_check_branch
          %387 = sbr.rel (%p385) target = $region56
        $region55: #{tpu_custom_call.1} parent=51 // pred_region
          %s388 = sand.u32 %s157, 1
          %s389 = scalar_lea.sflag [#allocation4], %s388
          %s390 = sand.u32 %s157, 1
          %s391 = smul.addr %s390, 2
          %s392 = scalar_lea.vmem [#allocation5], %s391
          %393 = dma.done %s389, 32
        $region56: #{tpu_custom_call.1} parent=51 // pred_fallthru
          _
      $region52: #{tpu_custom_call.1} parent=5 // pred_fallthru
        _
    $region6: #{tpu_custom_call.1} parent=1 // loop_footer
      %s21 = sadd.s32 1, %s17
    $region7: #{tpu_custom_call.1} parent=1 // loop_footer_branch
      %16 = sbr.rel target = $region3
    $region8: #{tpu_custom_call.1} parent=1 // loop_exit
      _
    %394 = vsyncpa [#allocation3], 1
    %s395 = scalar_lea.sflag [#allocation3], 1
    %396 = vsyncpa %s395, 1
    %397 = vsyncpa [#allocation4], 1
    %s398 = scalar_lea.sflag [#allocation4], 1
    %399 = vsyncpa %s398, 1

</llo_original>
